<compile_context>
chip_gen: v6e
topology: v6e:2x2x1
jax: 0.10.0
libtpu: 0.0.40
codegen_flags: <defaults>
</compile_context>

<pallas_src>
import jax
import jax.numpy as jnp
from jax.experimental import pallas as pl
from jax.experimental.pallas import tpu as pltpu


def _round_up(n, m):
    return (n + m - 1) // m * m


def _prep_params(V, w):
    """Fold parameters into the kernel's resident operands.

    Returns:
      vw_bf:          (F, K+1) bf16   concat([V, w], axis=1)   (MXU operand)
      neg_half_s_bf:  (F, 1)   bf16   -0.5 * sum_k V[:, k]^2   (MXU mat-vec RHS)
    """
    w_col = jnp.reshape(w, (-1, 1))
    vw_bf = jnp.concatenate([V, w_col], axis=1).astype(jnp.bfloat16)
    neg_half_s = -0.5 * jnp.sum(V.astype(jnp.float32) ** 2, axis=1, keepdims=True)
    return vw_bf, neg_half_s.astype(jnp.bfloat16)


def fm_kernel(x_ref, vw_ref, nhs_ref, b_ref, o_ref):
    """One batch tile of the FM forward pass.

    x_ref:   (TB, F)    f32   VMEM   native-width input tile (pipelined)
    vw_ref:  (F, K+1)   bf16  VMEM   concat([V, w], axis=1), resident
    nhs_ref: (F, 1)     bf16  VMEM   -0.5 * sum_k V^2 column, resident
    b_ref:   (1, 1)     f32   SMEM   linear bias
    o_ref:   (TB, 1)    f32   VMEM   sigmoid(linear + interaction)
    """
    x = x_ref[...]                                   # (TB, F) f32
    x_bf = x.astype(jnp.bfloat16)

    # Main MXU matmul: columns [0, K) are x @ V, column K is x @ w.
    xvw = jnp.dot(x_bf, vw_ref[...], preferred_element_type=jnp.float32)
    k = vw_ref.shape[1] - 1
    xv = xvw[:, :k]                                  # (TB, K) f32
    lin = xvw[:, k:]                                 # (TB, 1) f32

    # +0.5 * sum_k (xV)_k^2  -- small MXU mat-vec (no XLU lane reduce per row).
    sq_xv = (xv * xv).astype(jnp.bfloat16)
    half = jnp.full((k, 1), 0.5, dtype=jnp.bfloat16)
    pos = jnp.dot(sq_xv, half, preferred_element_type=jnp.float32)       # (TB, 1)

    # -0.5 * sum_f x_f^2 * sum_k V_fk^2  -- second small MXU mat-vec.
    sq_x = (x * x).astype(jnp.bfloat16)
    neg = jnp.dot(sq_x, nhs_ref[...], preferred_element_type=jnp.float32)  # (TB, 1)

    o_ref[...] = jax.nn.sigmoid(lin + b_ref[0, 0] + pos + neg).astype(o_ref.dtype)


def _choose_batch_tile(batch, feat, block_b):
    """Batch tile: big (amortize ~0.35us/step), but >=2 grid steps and VMEM-safe."""
    # (a) keep the double-buffered f32 x tile pair within ~16 MiB of VMEM.
    vmem_cap = max(8, ((16 << 20) // (2 * 4 * feat)) // 8 * 8)
    # (b) guarantee >= 2 grid steps so both v7x TensorCores get work.
    half = _round_up(-(-batch // 2), 8)
    tb = min(block_b, vmem_cap, half)
    tb = max(8, tb - tb % 8)
    if tb >= batch:
        return batch          # single block covering the whole batch (any size)
    return tb


def factorization_machine(x, V, w, b, *, block_b=4096):
    """FM forward. x: (B, F), V: (F, K), w: (F, 1) (= linear.weight.T), b: scalar.

    Returns sigmoid probabilities of shape (B, 1), f32.
    """
    B, F = x.shape
    K = V.shape[1]

    tb = _choose_batch_tile(B, F, block_b)
    num_tiles = -(-B // tb)                          # ragged last tile is fine

    vw_bf, neg_half_s_bf = _prep_params(V, w)
    b2d = jnp.reshape(b, (1, 1)).astype(jnp.float32)

    out = pl.pallas_call(
        fm_kernel,
        out_shape=jax.ShapeDtypeStruct((B, 1), jnp.float32),
        grid=(num_tiles,),
        in_specs=[
            pl.BlockSpec((tb, F), lambda i: (i, 0)),          # x tile, native width
            pl.BlockSpec((F, K + 1), lambda i: (0, 0)),       # [V | w] resident
            pl.BlockSpec((F, 1), lambda i: (0, 0)),           # -0.5*sum_k V^2 resident
            pl.BlockSpec((1, 1), lambda i: (0, 0),
                         memory_space=pltpu.MemorySpace.SMEM),  # bias scalar
        ],
        out_specs=pl.BlockSpec((tb, 1), lambda i: (i, 0)),
        compiler_params=pltpu.CompilerParams(
            dimension_semantics=("parallel",),   # shard batch steps across v7x TCs
            vmem_limit_bytes=32 * 1024 * 1024,
        ),
    )(x, vw_bf, neg_half_s_bf, b2d)

    return out


def reference_fm(x, V, w, b):
    """Straight f32 transcription of the PyTorch module."""
    lin = x @ jnp.reshape(w, (-1, 1)) + b
    inter = 0.5 * jnp.sum((x @ V) ** 2 - (x ** 2) @ (V ** 2), axis=1, keepdims=True)
    return jax.nn.sigmoid(lin + inter)


def reference_fm_mixed(x, V, w, b):
    """Replicates the kernel's numerics (bf16 MXU operands, f32 accumulation)."""
    f32 = jnp.float32
    vw_bf, neg_half_s_bf = _prep_params(V, w)
    K = V.shape[1]
    x_bf = x.astype(jnp.bfloat16)
    xvw = jnp.dot(x_bf, vw_bf, preferred_element_type=f32)
    xv, lin = xvw[:, :K], xvw[:, K:]
    pos = jnp.dot((xv * xv).astype(jnp.bfloat16),
                  jnp.full((K, 1), 0.5, jnp.bfloat16), preferred_element_type=f32)
    x_f = x.astype(f32)
    neg = jnp.dot((x_f * x_f).astype(jnp.bfloat16), neg_half_s_bf,
                  preferred_element_type=f32)
    return jax.nn.sigmoid(lin + b + pos + neg)


if __name__ == "__main__":
    num_features = 40
    num_factors = 12
    batch = 200

    key = jax.random.PRNGKey(0)
    kx, kv, kw, kb = jax.random.split(key, 4)

    # Parameter init matching the module's shapes:
    #   linear: weight (1, F) -> passed transposed as (F, 1); bias scalar
    #   V: (F, K) ~ N(0, 1) * 0.01
    bound = 1.0 / jnp.sqrt(jnp.float32(num_features))
    w = jax.random.uniform(kw, (num_features, 1), jnp.float32, -bound, bound)
    b = jax.random.uniform(kb, (), jnp.float32, -bound, bound)
    V = jax.random.normal(kv, (num_features, num_factors), jnp.float32) * 0.01
    x = jax.random.normal(kx, (batch, num_features), jnp.float32)

    # Default tiling: tb = 104 -> 2 grid steps, ragged last tile.
    out = factorization_machine(x, V, w, b)
    out = jax.block_until_ready(out)
    assert out.shape == (batch, 1)

    # Smaller tile exercises a longer grid (4 steps) + the ragged edge again.
    out_small = factorization_machine(x, V, w, b, block_b=64)
    out_small = jax.block_until_ready(out_small)

    ref_mixed = reference_fm_mixed(x, V, w, b)   # same numerics as the kernel
    ref_f32 = reference_fm(x, V, w, b)           # full-precision reference

    assert jnp.allclose(out, ref_mixed, atol=1e-4, rtol=1e-4), (
        float(jnp.max(jnp.abs(out - ref_mixed))))
    assert jnp.allclose(out, ref_f32, atol=5e-3, rtol=5e-3), (
        float(jnp.max(jnp.abs(out - ref_f32))))
    assert jnp.allclose(out_small, out, atol=1e-5, rtol=1e-5), (
        float(jnp.max(jnp.abs(out_small - out))))

    print("KERNEL_OK")
</pallas_src>

<mosaic_0001>
module attributes {stable_mosaic.version = 11 : i64} {
  func.func @fm_kernel(%arg0: i32, %arg1: memref<104x40xf32, #tpu.memory_space<vmem>>, %arg2: memref<40x13xbf16, #tpu.memory_space<vmem>>, %arg3: memref<40x1xbf16, #tpu.memory_space<vmem>>, %arg4: memref<1x1xf32, #tpu.memory_space<smem>>, %arg5: memref<104x1xf32, #tpu.memory_space<vmem>>) attributes {dimension_semantics = [#tpu.dimension_semantics<parallel>], iteration_bounds = array<i64: 2>, scalar_prefetch = 0 : i64, scratch_operands = 0 : i64, tpu.core_type = #tpu.core_type<tc>, window_params = [{transform_indices = @transform_0, window_bounds = array<i64: 104, 40>}, {pipeline_mode = #tpu.pipeline_mode<synchronous>, transform_indices = @transform_1, window_bounds = array<i64: 40, 13>}, {pipeline_mode = #tpu.pipeline_mode<synchronous>, transform_indices = @transform_2, window_bounds = array<i64: 40, 1>}, {transform_indices = @transform_3, window_bounds = array<i64: 1, 1>}, {transform_indices = @transform_4, window_bounds = array<i64: 104, 1>}]} {
    %c0 = arith.constant 0 : index
    %c0_0 = arith.constant 0 : index
    %0 = vector.load %arg1[%c0, %c0_0] : memref<104x40xf32, #tpu.memory_space<vmem>>, vector<104x40xf32>
    %1 = arith.truncf %0 : vector<104x40xf32> to vector<104x40xbf16>
    %c0_1 = arith.constant 0 : index
    %c0_2 = arith.constant 0 : index
    %2 = vector.load %arg2[%c0_1, %c0_2] : memref<40x13xbf16, #tpu.memory_space<vmem>>, vector<40x13xbf16>
    %cst = arith.constant dense<0.000000e+00> : vector<104x13xf32>
    %3 = tpu.matmul %1, %2, %cst {dimension_numbers = #tpu.dot_dimension_numbers<[1], [0], [0], [1], [0, 0, 1, 1], [], []>} : vector<104x40xbf16>, vector<40x13xbf16>, vector<104x13xf32> -> vector<104x13xf32>
    %4 = vector.extract_strided_slice %3 {offsets = [0, 0], sizes = [104, 12], strides = [1, 1]} : vector<104x13xf32> to vector<104x12xf32>
    %5 = vector.extract_strided_slice %3 {offsets = [0, 12], sizes = [104, 1], strides = [1, 1]} : vector<104x13xf32> to vector<104x1xf32>
    %6 = arith.mulf %4, %4 : vector<104x12xf32>
    %7 = arith.truncf %6 : vector<104x12xf32> to vector<104x12xbf16>
    %cst_3 = arith.constant 5.000000e-01 : bf16
    %8 = vector.broadcast %cst_3 : bf16 to vector<12x1xbf16>
    %cst_4 = arith.constant dense<0.000000e+00> : vector<104x1xf32>
    %9 = tpu.matmul %7, %8, %cst_4 {dimension_numbers = #tpu.dot_dimension_numbers<[1], [0], [0], [1], [0, 0, 1, 1], [], []>} : vector<104x12xbf16>, vector<12x1xbf16>, vector<104x1xf32> -> vector<104x1xf32>
    %10 = arith.mulf %0, %0 : vector<104x40xf32>
    %11 = arith.truncf %10 : vector<104x40xf32> to vector<104x40xbf16>
    %c0_5 = arith.constant 0 : index
    %c0_6 = arith.constant 0 : index
    %12 = vector.load %arg3[%c0_5, %c0_6] : memref<40x1xbf16, #tpu.memory_space<vmem>>, vector<40x1xbf16>
    %cst_7 = arith.constant dense<0.000000e+00> : vector<104x1xf32>
    %13 = tpu.matmul %11, %12, %cst_7 {dimension_numbers = #tpu.dot_dimension_numbers<[1], [0], [0], [1], [0, 0, 1, 1], [], []>} : vector<104x40xbf16>, vector<40x1xbf16>, vector<104x1xf32> -> vector<104x1xf32>
    %c0_8 = arith.constant 0 : index
    %c0_9 = arith.constant 0 : index
    %14 = memref.load %arg4[%c0_8, %c0_9] : memref<1x1xf32, #tpu.memory_space<smem>>
    %15 = vector.broadcast %14 : f32 to vector<104x1xf32>
    %16 = arith.addf %5, %15 : vector<104x1xf32>
    %17 = arith.addf %16, %9 : vector<104x1xf32>
    %18 = arith.addf %17, %13 : vector<104x1xf32>
    %19 = arith.negf %18 : vector<104x1xf32>
    %20 = math.exp %19 : vector<104x1xf32>
    %cst_10 = arith.constant 1.000000e+00 : f32
    %21 = vector.broadcast %cst_10 : f32 to vector<104x1xf32>
    %22 = arith.addf %21, %20 : vector<104x1xf32>
    %23 = arith.divf %21, %22 : vector<104x1xf32>
    %c0_11 = arith.constant 0 : index
    %c0_12 = arith.constant 0 : index
    %24 = vector.load %arg5[%c0_11, %c0_12] : memref<104x1xf32, #tpu.memory_space<vmem>>, vector<104x1xf32>
    tpu.vector_store %arg5[%c0_11, %c0_12], %23 {strides = array<i32>} : memref<104x1xf32, #tpu.memory_space<vmem>>, vector<104x1xf32>,
    return
  }
  func.func @transform_0(%arg0: i32) -> (i32, i32) {
    %c0_i32 = arith.constant 0 : i32
    %c0_i32_0 = arith.constant 0 : i32
    return %arg0, %c0_i32 : i32, i32
  }
  func.func @transform_1(%arg0: i32) -> (i32, i32) {
    %c0_i32 = arith.constant 0 : i32
    %c0_i32_0 = arith.constant 0 : i32
    %c0_i32_1 = arith.constant 0 : i32
    return %c0_i32, %c0_i32_0 : i32, i32
  }
  func.func @transform_2(%arg0: i32) -> (i32, i32) {
    %c0_i32 = arith.constant 0 : i32
    %c0_i32_0 = arith.constant 0 : i32
    %c0_i32_1 = arith.constant 0 : i32
    return %c0_i32, %c0_i32_0 : i32, i32
  }
  func.func @transform_3(%arg0: i32) -> (i32, i32) {
    %c0_i32 = arith.constant 0 : i32
    %c0_i32_0 = arith.constant 0 : i32
    %c0_i32_1 = arith.constant 0 : i32
    return %c0_i32, %c0_i32_0 : i32, i32
  }
  func.func @transform_4(%arg0: i32) -> (i32, i32) {
    %c0_i32 = arith.constant 0 : i32
    %c0_i32_0 = arith.constant 0 : i32
    return %arg0, %c0_i32 : i32, i32
  }
}

</mosaic_0001>

<llo_original>
// kernel: tpu_custom_call.1
$region0: #{tpu_custom_call.1}
  #allocation0 [shape = 'u32[]', space=smem, size = 0x4, offset = 0x4, fixed_abs, tag = 'smem constant byte address 0x4 - core index']
  #allocation1 [shape = 'u32[144,128]{1,0:T(1,128)}', space=vmem, size = 0x12000, scoped, tag = 'internal scratch']
  #allocation2 [shape = 'f32[1,1]{1,0:T(1,128)S(6)}', space=smem, size = 0x200, scoped, tag = 'scoped memory for tpu_custom_call.1']
  %s0 = inlined_call_operand.vmem [shape: f32[200,40], index: 0, kind: input, shape index: {}]
  %s1 = inlined_call_operand.vmem [shape: bf16[40,13], index: 1, kind: input, shape index: {}]
  %s2 = inlined_call_operand.vmem [shape: bf16[40,1], index: 2, kind: input, shape index: {}]
  %s3 = inlined_call_operand.<no memory space> [shape: f32[1,1], index: 3, kind: input, shape index: {}]
  %s4 = inlined_call_operand.vmem [shape: f32[200,1], index: 4, kind: output, shape index: {}]
  %s5 = sld [smem:[#allocation0]]
  $region97: #{tpu_custom_call.1} parent=0
    _
  %s7 = ssub.s32 1, %s5
  %s8 = scalar_select 0, %s7, %s5
  %9 = sst [smem:[#allocation2]] %s3
  $region1: #{tpu_custom_call.1} parent=0
    #allocation3 [shape = 'u8[106496]{0}', space=vmem, size = 0x1a000, scoped, tag = 'output window, operand 0']
    loop: start=0, step=1, limit=4
    $region2: #{tpu_custom_call.1} parent=1 // loop_pre_header
      _
    $region3: #{tpu_custom_call.1} parent=1 // loop_header
      %s11 = sphi 0, %s15
      %p12 = scmp.ge.s32.totalorder %s11, 4
      %s21 = sphi 0, %s23
      %s24 = sphi 0, %s21
      %s25 = sphi 0, %s24
      %s41 = sphi 0, %s25
      %s45 = sphi 0, %s45
      %s47 = sphi 0, %s45
      %s48 = sphi 0, %s47
      %s62 = sphi 0, %s48
      %s66 = sphi 0, %s66
      %s68 = sphi 0, %s66
      %s69 = sphi 0, %s68
      %s83 = sphi 0, %s69
      %s87 = sphi 0, %s87
      %s89 = sphi 0, %s87
      %s90 = sphi 0, %s89
      %s104 = sphi 0, %s90
      %s110 = sphi 0, %s112
      %s113 = sphi 0, %s110
      %s114 = sphi 0, %s113
      %s130 = sphi 0, %s114
    $region4: #{tpu_custom_call.1} parent=1 // loop_header_branch
      %14 = sbr.rel (%p12) target = $region8
    $region5: #{tpu_custom_call.1} parent=1 // loop_body
      %s16 = ssub.s32 %s11, 1
      %s17 = ssub.s32 %s11, 2
      %s18 = sadd.s32 %s11, 1
      %s19 = ssub.s32 %s11, %s18
      %p20 = scmp.eq.s32.totalorder %s19, 0
      %s22 = sadd.s32 %s21, 1
      %s23 = scalar_select %p20, %s21, %s22
      %p26 = pneg %p20
      %p27 = scmp.eq.s32.totalorder %s11, 1
      %p28 = por %p26, %p27
      %p29 = scmp.ne.s32.totalorder %s21, %s24
      %p30 = scmp.eq.s32.totalorder %s11, 0
      %p31 = por %p29, %p30
      %p32 = scmp.ne.s32.totalorder %s21, %s24
      %p33 = scmp.eq.s32.totalorder %s16, 1
      %p34 = por %p32, %p33
      %p35 = scmp.ne.s32.totalorder %s24, %s25
      %p36 = scmp.eq.s32.totalorder %s16, 0
      %p37 = por %p35, %p36
      %p38 = scmp.ne.s32.totalorder %s24, %s25
      %p39 = scmp.eq.s32.totalorder %s17, 1
      %p40 = por %p38, %p39
      %p42 = scmp.ne.s32.totalorder %s25, %s41
      %p43 = scmp.eq.s32.totalorder %s17, 0
      %p44 = por %p42, %p43
      %s46 = sadd.s32 %s45, 1
      %p49 = scmp.eq.s32.totalorder %s11, 1
      %p50 = scmp.ne.s32.totalorder %s45, %s47
      %p51 = scmp.eq.s32.totalorder %s11, 0
      %p52 = por %p50, %p51
      %p53 = scmp.ne.s32.totalorder %s45, %s47
      %p54 = scmp.eq.s32.totalorder %s16, 1
      %p55 = por %p53, %p54
      %p56 = scmp.ne.s32.totalorder %s47, %s48
      %p57 = scmp.eq.s32.totalorder %s16, 0
      %p58 = por %p56, %p57
      %p59 = scmp.ne.s32.totalorder %s47, %s48
      %p60 = scmp.eq.s32.totalorder %s17, 1
      %p61 = por %p59, %p60
      %p63 = scmp.ne.s32.totalorder %s48, %s62
      %p64 = scmp.eq.s32.totalorder %s17, 0
      %p65 = por %p63, %p64
      %s67 = sadd.s32 %s66, 1
      %p70 = scmp.eq.s32.totalorder %s11, 1
      %p71 = scmp.ne.s32.totalorder %s66, %s68
      %p72 = scmp.eq.s32.totalorder %s11, 0
      %p73 = por %p71, %p72
      %p74 = scmp.ne.s32.totalorder %s66, %s68
      %p75 = scmp.eq.s32.totalorder %s16, 1
      %p76 = por %p74, %p75
      %p77 = scmp.ne.s32.totalorder %s68, %s69
      %p78 = scmp.eq.s32.totalorder %s16, 0
      %p79 = por %p77, %p78
      %p80 = scmp.ne.s32.totalorder %s68, %s69
      %p81 = scmp.eq.s32.totalorder %s17, 1
      %p82 = por %p80, %p81
      %p84 = scmp.ne.s32.totalorder %s69, %s83
      %p85 = scmp.eq.s32.totalorder %s17, 0
      %p86 = por %p84, %p85
      %s88 = sadd.s32 %s87, 1
      %p91 = scmp.eq.s32.totalorder %s11, 1
      %p92 = scmp.ne.s32.totalorder %s87, %s89
      %p93 = scmp.eq.s32.totalorder %s11, 0
      %p94 = por %p92, %p93
      %p95 = scmp.ne.s32.totalorder %s87, %s89
      %p96 = scmp.eq.s32.totalorder %s16, 1
      %p97 = por %p95, %p96
      %p98 = scmp.ne.s32.totalorder %s89, %s90
      %p99 = scmp.eq.s32.totalorder %s16, 0
      %p100 = por %p98, %p99
      %p101 = scmp.ne.s32.totalorder %s89, %s90
      %p102 = scmp.eq.s32.totalorder %s17, 1
      %p103 = por %p101, %p102
      %p105 = scmp.ne.s32.totalorder %s90, %s104
      %p106 = scmp.eq.s32.totalorder %s17, 0
      %p107 = por %p105, %p106
      %s108 = ssub.s32 %s11, %s18
      %p109 = scmp.eq.s32.totalorder %s108, 0
      %s111 = sadd.s32 %s110, 1
      %s112 = scalar_select %p109, %s110, %s111
      %p115 = pneg %p109
      %p116 = scmp.eq.s32.totalorder %s11, 1
      %p117 = por %p115, %p116
      %p118 = scmp.ne.s32.totalorder %s110, %s113
      %p119 = scmp.eq.s32.totalorder %s11, 0
      %p120 = por %p118, %p119
      %p121 = scmp.ne.s32.totalorder %s110, %s113
      %p122 = scmp.eq.s32.totalorder %s16, 1
      %p123 = por %p121, %p122
      %p124 = scmp.ne.s32.totalorder %s113, %s114
      %p125 = scmp.eq.s32.totalorder %s16, 0
      %p126 = por %p124, %p125
      %p127 = scmp.ne.s32.totalorder %s113, %s114
      %p128 = scmp.eq.s32.totalorder %s17, 1
      %p129 = por %p127, %p128
      %p131 = scmp.ne.s32.totalorder %s114, %s130
      %p132 = scmp.eq.s32.totalorder %s17, 0
      %p133 = por %p131, %p132
      %p134 = scmp.le.s32.totalorder 1, %s11
      %p135 = scmp.lt.s32.totalorder %s11, 3
      %p136 = pnand %p134, %p135
      %p137 = pneg %p136
      // Predicated region
      $region9: #{tpu_custom_call.1} parent=5 // pred_check
        _
      $region10: #{tpu_custom_call.1} parent=5 // pred_check_branch
        %139 = sbr.rel (%p136) target = $region12
      $region11: #{tpu_custom_call.1} parent=5 // pred_region
        %s140 = ssub.s32 %s11, 1
        // Predicated region
        $region13: #{tpu_custom_call.1} parent=11 // pred_check
          %p141 = pneg %p58
        $region14: #{tpu_custom_call.1} parent=11 // pred_check_branch
          %143 = sbr.rel (%p141) target = $region16
        $region15: #{tpu_custom_call.1} parent=11 // pred_region
          _
        $region16: #{tpu_custom_call.1} parent=11 // pred_fallthru
          _
        // Predicated region
        $region17: #{tpu_custom_call.1} parent=11 // pred_check
          %p144 = pneg %p79
        $region18: #{tpu_custom_call.1} parent=11 // pred_check_branch
          %146 = sbr.rel (%p144) target = $region20
        $region19: #{tpu_custom_call.1} parent=11 // pred_region
          _
        $region20: #{tpu_custom_call.1} parent=11 // pred_fallthru
          _
        // Predicated region
        $region21: #{tpu_custom_call.1} parent=11 // pred_check
          %p147 = pneg %p100
        $region22: #{tpu_custom_call.1} parent=11 // pred_check_branch
          %149 = sbr.rel (%p147) target = $region24
        $region23: #{tpu_custom_call.1} parent=11 // pred_region
          _
        $region24: #{tpu_custom_call.1} parent=11 // pred_fallthru
          _
      $region12: #{tpu_custom_call.1} parent=5 // pred_fallthru
        _
      %p150 = scmp.lt.s32.totalorder %s11, 2
      // Predicated region
      $region25: #{tpu_custom_call.1} parent=5 // pred_check
        %p151 = pneg %p150
      $region26: #{tpu_custom_call.1} parent=5 // pred_check_branch
        %153 = sbr.rel (%p151) target = $region28
      $region27: #{tpu_custom_call.1} parent=5 // pred_region
        // Predicated region
        $region29: #{tpu_custom_call.1} parent=27 // pred_check
          %p154 = pneg %p31
        $region30: #{tpu_custom_call.1} parent=27 // pred_check_branch
          %156 = sbr.rel (%p154) target = $region32
        $region31: #{tpu_custom_call.1} parent=27 // pred_region
          %s157 = smul.u32 13, %s11
          %s158 = ssub.s32 25, %s157
          %p159 = scmp.lt.s32.totalorder %s158, 13
          %s160 = scalar_select %p159, %s158, 13
          %s161 = smul.u32 128, %s160
          %p162 = scmp.lt.s32.totalorder %s157, 24
          %s163 = scalar_select %p162, %s157, 24
          %s164 = smul.addr %s163, 8
          %s165 = scalar_lea.vmem %s0, %s164
          %s166 = smul.u32 13, %s11
          %s167 = ssub.s32 25, %s166
          %p168 = scmp.lt.s32.totalorder %s167, 13
          %s169 = scalar_select %p168, %s167, 13
          %s170 = smul.u32 128, %s169
        $region32: #{tpu_custom_call.1} parent=27 // pred_fallthru
          _
      $region28: #{tpu_custom_call.1} parent=5 // pred_fallthru
        _
      %p171 = scmp.le.s32.totalorder 1, %s11
      %p172 = scmp.lt.s32.totalorder %s11, 3
      %p173 = pnand %p171, %p172
      %p174 = pneg %p173
      // Predicated region
      $region33: #{tpu_custom_call.1} parent=5 // pred_check
        _
      $region34: #{tpu_custom_call.1} parent=5 // pred_check_branch
        %176 = sbr.rel (%p173) target = $region36
      $region35: #{tpu_custom_call.1} parent=5 // pred_region
        %s177 = ssub.s32 %s11, 1
        %s178 = smul.u32 13, %s16
        %s179 = ssub.s32 25, %s178
        %p180 = scmp.lt.s32.totalorder %s179, 13
        %s181 = scalar_select %p180, %s179, 13
        %s182 = smul.u32 128, %s181
        %p183 = scmp.lt.s32.totalorder %s178, 24
        %s184 = scalar_select %p183, %s178, 24
        %s185 = smul.addr %s184, 8
        %s186 = scalar_lea.vmem %s0, %s185
        %p187 = pneg %p37
        %p188 = pneg %p34
        %p189 = pneg %p58
        %p190 = pneg %p55
        %p191 = pneg %p79
        %p192 = pneg %p76
        %p193 = pneg %p100
        %p194 = pneg %p97
        %p195 = pneg %p126
        %p196 = pneg %p123
        %s197 = sand.u32 %s113, 1
        %s198 = sand.u32 %s113, 1
        %s199 = smul.addr %s198, 104
        %s200 = scalar_lea.vmem [#allocation3], %s199
        %s201 = smul.u32 13, %s16
        %s202 = ssub.s32 25, %s201
        %p203 = scmp.lt.s32.totalorder %s202, 13
        %s204 = scalar_select %p203, %s202, 13
        %s205 = smul.u32 128, %s204
        %p206 = scmp.lt.s32.totalorder %s201, 24
        %s207 = scalar_select %p206, %s201, 24
        %s208 = smul.addr %s207, 8
        %s209 = scalar_lea.vmem %s0, %s208
        %s210 = smul.u32 13, %s16
        %s211 = ssub.s32 25, %s210
        %p212 = scmp.lt.s32.totalorder %s211, 13
        %s213 = scalar_select %p212, %s211, 13
        %s214 = smul.u32 128, %s213
        %s215 = smul.u32 13, %s16
        %s216 = ssub.s32 25, %s215
        %p217 = scmp.lt.s32.totalorder %s216, 13
        %s218 = scalar_select %p217, %s216, 13
        %s219 = smul.u32 128, %s218
        %v222 = vld [vmem:[%s209] sm:$0xff]
        %v223 = vld [vmem:[%s209 + $0x8] sm:$0xff]
        %v224 = vld [vmem:[%s209 + $0x10] sm:$0xff]
        %v225 = vld [vmem:[%s209 + $0x18] sm:$0xff]
        %v226 = vld [vmem:[%s209 + $0x20] sm:$0xff]
        %v227 = vld [vmem:[%s209 + $0x28] sm:$0xff]
        %v228 = vld [vmem:[%s209 + $0x30] sm:$0xff]
        %v229 = vld [vmem:[%s209 + $0x38] sm:$0xff]
        %v230 = vld [vmem:[%s209 + $0x40] sm:$0xff]
        %v231 = vld [vmem:[%s209 + $0x48] sm:$0xff]
        %v232 = vld [vmem:[%s209 + $0x50] sm:$0xff]
        %v233 = vld [vmem:[%s209 + $0x58] sm:$0xff]
        %v234 = vld [vmem:[%s209 + $0x60] sm:$0xff]
        %v235 = vpack.c.bf16 %v223, %v222
        %v236 = vpack.c.bf16 %v225, %v224
        %v237 = vpack.c.bf16 %v227, %v226
        %v238 = vpack.c.bf16 %v229, %v228
        %v239 = vpack.c.bf16 %v231, %v230
        %v240 = vpack.c.bf16 %v233, %v232
        %v241 = vpack.c.bf16 %v234, %v234
        %v242 = vld [vmem:[%s1] sm:$0xf]
        %v243 = vld [vmem:[%s1 + $0x4] sm:$0xf]
        %v244 = vld [vmem:[%s1 + $0x8] sm:$0xf]
        %v245 = vld [vmem:[%s1 + $0xc] sm:$0xf]
        %v246 = vld [vmem:[%s1 + $0x10] sm:$0xf]
        %v252 = vunpack.c.l.b16 %v242
        %v253 = vunpack.c.l.b16 %v243
        %v254 = vunpack.c.l.b16 %v244
        %v255 = vunpack.c.l.b16 %v245
        %v256 = vunpack.c.l.b16 %v246
        %v257 = vpack.c.b16 %v253, %v252
        %v258 = vpack.c.b16 %v255, %v254
        %v259 = vpack.c.b16 %v256, %v256
        %vm262 = vcmask 326656
        %v264 = vsel %vm262, %v235, 0
        %v267 = vsel %vm262, %v236, 0
        %v270 = vsel %vm262, %v237, 0
        %v273 = vsel %vm262, %v238, 0
        %v276 = vsel %vm262, %v239, 0
        %v279 = vsel %vm262, %v240, 0
        %v282 = vsel %vm262, %v241, 0
        %vm284 = vcmask 1043456
        %v286 = vsel %vm284, %v259, 0
        %288 = vmatprep.subr.bf16.mxu0 0
        %289 = vmatpush1.bf16.msra.mxu0 0
        %290 = vmatprep.subr.bf16.mxu0 0
        %291 = vmatpush1.bf16.msra.mxu0 0
        %292 = vmatprep.subr.bf16.mxu0 0
        %293 = vmatpush1.bf16.msra.mxu0 0
        %294 = vmatprep.subr.bf16.mxu0 0
        %295 = vmatpush1.bf16.msra.mxu0 0
        %296 = vmatprep.subr.bf16.mxu0 0
        %297 = vmatpush1.bf16.msra.mxu0 0
        %298 = vmatprep.subr.bf16.mxu0 0
        %299 = vmatpush1.bf16.msra.mxu0 %v286
        %300 = vmatprep.subr.bf16.mxu0 0
        %301 = vmatpush1.bf16.msra.mxu0 %v258
        %302 = vmatprep.subr.bf16.mxu0 0
        %303 = vmatpush1.bf16.msra.mxu0 %v257
        %304 = vmatprep.subr.bf16.mxu0 0
        %305 = vmatpush2.bf16.msra.mxu0 0
        %306 = vmatprep.subr.bf16.mxu0 0
        %307 = vmatpush2.bf16.msra.mxu0 0
        %308 = vmatprep.subr.bf16.mxu0 0
        %309 = vmatpush2.bf16.msra.mxu0 0
        %310 = vmatprep.subr.bf16.mxu0 0
        %311 = vmatpush2.bf16.msra.mxu0 0
        %312 = vmatprep.subr.bf16.mxu0 0
        %313 = vmatpush2.bf16.msra.mxu0 0
        %314 = vmatprep.subr.bf16.mxu0 0
        %315 = vmatpush2.bf16.msra.mxu0 0
        %316 = vmatprep.subr.bf16.mxu0 0
        %317 = vmatpush2.bf16.msra.mxu0 0
        %318 = vmatprep.subr.bf16.mxu0 0
        %319 = vmatpush2.bf16.msra.mxu0 0
        %320 = vmatprep.mubr.bf16.mxu0 0
        %321 = vmatmul.mubr.bf16.gmra.mxu0 %v264
        %v322 = vpop.f32.mrf.mxu0
        %v323 = vadd.f32 0.0, %v322
        %v324 = vpop.f32.mrf.mxu0
        %v325 = vpop.f32.mrf.mxu0
        %v326 = vadd.f32 0.0, %v325
        %v327 = vpop.f32.mrf.mxu0
        %328 = vmatprep.mubr.bf16.mxu0 0
        %329 = vmatmul.mubr.bf16.gmra.mxu0 %v267
        %v330 = vpop.f32.mrf.mxu0
        %v331 = vadd.f32 0.0, %v330
        %v332 = vpop.f32.mrf.mxu0
        %v333 = vpop.f32.mrf.mxu0
        %v334 = vadd.f32 0.0, %v333
        %v335 = vpop.f32.mrf.mxu0
        %336 = vmatprep.mubr.bf16.mxu0 0
        %337 = vmatmul.mubr.bf16.gmra.mxu0 %v270
        %v338 = vpop.f32.mrf.mxu0
        %v339 = vadd.f32 0.0, %v338
        %v340 = vpop.f32.mrf.mxu0
        %v341 = vpop.f32.mrf.mxu0
        %v342 = vadd.f32 0.0, %v341
        %v343 = vpop.f32.mrf.mxu0
        %344 = vmatprep.mubr.bf16.mxu0 0
        %345 = vmatmul.mubr.bf16.gmra.mxu0 %v273
        %v346 = vpop.f32.mrf.mxu0
        %v347 = vadd.f32 0.0, %v346
        %v348 = vpop.f32.mrf.mxu0
        %v349 = vpop.f32.mrf.mxu0
        %v350 = vadd.f32 0.0, %v349
        %v351 = vpop.f32.mrf.mxu0
        %352 = vmatprep.mubr.bf16.mxu0 0
        %353 = vmatmul.mubr.bf16.gmra.mxu0 %v276
        %v354 = vpop.f32.mrf.mxu0
        %v355 = vadd.f32 0.0, %v354
        %v356 = vpop.f32.mrf.mxu0
        %v357 = vpop.f32.mrf.mxu0
        %v358 = vadd.f32 0.0, %v357
        %v359 = vpop.f32.mrf.mxu0
        %360 = vmatprep.mubr.bf16.mxu0 0
        %361 = vmatmul.mubr.bf16.gmra.mxu0 %v279
        %v362 = vpop.f32.mrf.mxu0
        %v363 = vadd.f32 0.0, %v362
        %v364 = vpop.f32.mrf.mxu0
        %v365 = vpop.f32.mrf.mxu0
        %v366 = vadd.f32 0.0, %v365
        %v367 = vpop.f32.mrf.mxu0
        %368 = vmatprep.mubr.bf16.mxu0 0
        %369 = vmatmul.mubr.bf16.gmra.mxu0 %v282
        %v370 = vpop.f32.mrf.mxu0
        %v371 = vadd.f32 0.0, %v370
        %v372 = vpop.f32.mrf.mxu0
        %v373 = vpop.f32.mrf.mxu0
        %v374 = vpop.f32.mrf.mxu0
        %375 = vdwg.mxu0
        %v376 = vmul.f32 %v323, %v323
        %v377 = vmul.f32 %v326, %v326
        %v378 = vmul.f32 %v331, %v331
        %v379 = vmul.f32 %v334, %v334
        %v380 = vmul.f32 %v339, %v339
        %v381 = vmul.f32 %v342, %v342
        %v382 = vmul.f32 %v347, %v347
        %v383 = vmul.f32 %v350, %v350
        %v384 = vmul.f32 %v355, %v355
        %v385 = vmul.f32 %v358, %v358
        %v386 = vmul.f32 %v363, %v363
        %v387 = vmul.f32 %v366, %v366
        %v388 = vmul.f32 %v371, %v371
        %v389 = vpack.c.bf16 %v377, %v376
        %v390 = vpack.c.bf16 %v379, %v378
        %v391 = vpack.c.bf16 %v381, %v380
        %v392 = vpack.c.bf16 %v383, %v382
        %v393 = vpack.c.bf16 %v385, %v384
        %v394 = vpack.c.bf16 %v387, %v386
        %v395 = vpack.c.bf16 %v388, %v388
        %vm396 = vcmask 97280
        %v398 = vsel %vm396, %v389, 0
        %v401 = vsel %vm396, %v390, 0
        %v404 = vsel %vm396, %v391, 0
        %v407 = vsel %vm396, %v392, 0
        %v410 = vsel %vm396, %v393, 0
        %v413 = vsel %vm396, %v394, 0
        %v416 = vsel %vm396, %v395, 0
        %vm418 = vcmask 1045504
        %v420 = vsel %vm418, 1056980736, 0
        %422 = vmatprep.subr.bf16.mxu0 0
        %423 = vmatpush1.bf16.msra.mxu0 0
        %424 = vmatprep.subr.bf16.mxu0 0
        %425 = vmatpush1.bf16.msra.mxu0 0
        %426 = vmatprep.subr.bf16.mxu0 0
        %427 = vmatpush1.bf16.msra.mxu0 0
        %428 = vmatprep.subr.bf16.mxu0 0
        %429 = vmatpush1.bf16.msra.mxu0 0
        %430 = vmatprep.subr.bf16.mxu0 0
        %431 = vmatpush1.bf16.msra.mxu0 0
        %432 = vmatprep.subr.bf16.mxu0 0
        %433 = vmatpush1.bf16.msra.mxu0 0
        %434 = vmatprep.subr.bf16.mxu0 0
        %435 = vmatpush1.bf16.msra.mxu0 0
        %436 = vmatprep.subr.bf16.mxu0 0
        %437 = vmatpush1.bf16.msra.mxu0 %v420
        %438 = vmatprep.subr.bf16.mxu0 0
        %439 = vmatpush2.bf16.msra.mxu0 0
        %440 = vmatprep.subr.bf16.mxu0 0
        %441 = vmatpush2.bf16.msra.mxu0 0
        %442 = vmatprep.subr.bf16.mxu0 0
        %443 = vmatpush2.bf16.msra.mxu0 0
        %444 = vmatprep.subr.bf16.mxu0 0
        %445 = vmatpush2.bf16.msra.mxu0 0
        %446 = vmatprep.subr.bf16.mxu0 0
        %447 = vmatpush2.bf16.msra.mxu0 0
        %448 = vmatprep.subr.bf16.mxu0 0
        %449 = vmatpush2.bf16.msra.mxu0 0
        %450 = vmatprep.subr.bf16.mxu0 0
        %451 = vmatpush2.bf16.msra.mxu0 0
        %452 = vmatprep.subr.bf16.mxu0 0
        %453 = vmatpush2.bf16.msra.mxu0 0
        %454 = vmatprep.mubr.bf16.mxu0 0
        %455 = vmatmul.mubr.bf16.gmra.mxu0 %v398
        %v456 = vpop.f32.mrf.mxu0
        %v457 = vadd.f32 0.0, %v456
        %v458 = vpop.f32.mrf.mxu0
        %v459 = vpop.f32.mrf.mxu0
        %v460 = vadd.f32 0.0, %v459
        %v461 = vpop.f32.mrf.mxu0
        %462 = vmatprep.mubr.bf16.mxu0 0
        %463 = vmatmul.mubr.bf16.gmra.mxu0 %v401
        %v464 = vpop.f32.mrf.mxu0
        %v465 = vadd.f32 0.0, %v464
        %v466 = vpop.f32.mrf.mxu0
        %v467 = vpop.f32.mrf.mxu0
        %v468 = vadd.f32 0.0, %v467
        %v469 = vpop.f32.mrf.mxu0
        %470 = vmatprep.mubr.bf16.mxu0 0
        %471 = vmatmul.mubr.bf16.gmra.mxu0 %v404
        %v472 = vpop.f32.mrf.mxu0
        %v473 = vadd.f32 0.0, %v472
        %v474 = vpop.f32.mrf.mxu0
        %v475 = vpop.f32.mrf.mxu0
        %v476 = vadd.f32 0.0, %v475
        %v477 = vpop.f32.mrf.mxu0
        %478 = vmatprep.mubr.bf16.mxu0 0
        %479 = vmatmul.mubr.bf16.gmra.mxu0 %v407
        %v480 = vpop.f32.mrf.mxu0
        %v481 = vadd.f32 0.0, %v480
        %v482 = vpop.f32.mrf.mxu0
        %v483 = vpop.f32.mrf.mxu0
        %v484 = vadd.f32 0.0, %v483
        %v485 = vpop.f32.mrf.mxu0
        %486 = vmatprep.mubr.bf16.mxu0 0
        %487 = vmatmul.mubr.bf16.gmra.mxu0 %v410
        %v488 = vpop.f32.mrf.mxu0
        %v489 = vadd.f32 0.0, %v488
        %v490 = vpop.f32.mrf.mxu0
        %v491 = vpop.f32.mrf.mxu0
        %v492 = vadd.f32 0.0, %v491
        %v493 = vpop.f32.mrf.mxu0
        %494 = vmatprep.mubr.bf16.mxu0 0
        %495 = vmatmul.mubr.bf16.gmra.mxu0 %v413
        %v496 = vpop.f32.mrf.mxu0
        %v497 = vadd.f32 0.0, %v496
        %v498 = vpop.f32.mrf.mxu0
        %v499 = vpop.f32.mrf.mxu0
        %v500 = vadd.f32 0.0, %v499
        %v501 = vpop.f32.mrf.mxu0
        %502 = vmatprep.mubr.bf16.mxu0 0
        %503 = vmatmul.mubr.bf16.gmra.mxu0 %v416
        %v504 = vpop.f32.mrf.mxu0
        %v505 = vadd.f32 0.0, %v504
        %v506 = vpop.f32.mrf.mxu0
        %v507 = vpop.f32.mrf.mxu0
        %v508 = vpop.f32.mrf.mxu0
        %509 = vdwg.mxu0
        %v510 = vmul.f32 %v222, %v222
        %v511 = vmul.f32 %v223, %v223
        %v512 = vmul.f32 %v224, %v224
        %v513 = vmul.f32 %v225, %v225
        %v514 = vmul.f32 %v226, %v226
        %v515 = vmul.f32 %v227, %v227
        %v516 = vmul.f32 %v228, %v228
        %v517 = vmul.f32 %v229, %v229
        %v518 = vmul.f32 %v230, %v230
        %v519 = vmul.f32 %v231, %v231
        %v520 = vmul.f32 %v232, %v232
        %v521 = vmul.f32 %v233, %v233
        %v522 = vmul.f32 %v234, %v234
        %v523 = vpack.c.bf16 %v511, %v510
        %v524 = vpack.c.bf16 %v513, %v512
        %v525 = vpack.c.bf16 %v515, %v514
        %v526 = vpack.c.bf16 %v517, %v516
        %v527 = vpack.c.bf16 %v519, %v518
        %v528 = vpack.c.bf16 %v521, %v520
        %v529 = vpack.c.bf16 %v522, %v522
        %v530 = vld [vmem:[%s2] sm:$0xf]
        %v531 = vld [vmem:[%s2 + $0x4] sm:$0xf]
        %v532 = vld [vmem:[%s2 + $0x8] sm:$0xf]
        %v533 = vld [vmem:[%s2 + $0xc] sm:$0xf]
        %v534 = vld [vmem:[%s2 + $0x10] sm:$0xf]
        %v540 = vunpack.c.l.b16 %v530
        %v541 = vunpack.c.l.b16 %v531
        %v542 = vunpack.c.l.b16 %v532
        %v543 = vunpack.c.l.b16 %v533
        %v544 = vunpack.c.l.b16 %v534
        %v545 = vpack.c.b16 %v541, %v540
        %v546 = vpack.c.b16 %v543, %v542
        %v547 = vpack.c.b16 %v544, %v544
        %v551 = vsel %vm262, %v523, 0
        %v554 = vsel %vm262, %v524, 0
        %v557 = vsel %vm262, %v525, 0
        %v560 = vsel %vm262, %v526, 0
        %v563 = vsel %vm262, %v527, 0
        %v566 = vsel %vm262, %v528, 0
        %v569 = vsel %vm262, %v529, 0
        %v572 = vsel %vm284, %v547, 0
        %574 = vmatprep.subr.bf16.mxu0 0
        %575 = vmatpush1.bf16.msra.mxu0 0
        %576 = vmatprep.subr.bf16.mxu0 0
        %577 = vmatpush1.bf16.msra.mxu0 0
        %578 = vmatprep.subr.bf16.mxu0 0
        %579 = vmatpush1.bf16.msra.mxu0 0
        %580 = vmatprep.subr.bf16.mxu0 0
        %581 = vmatpush1.bf16.msra.mxu0 0
        %582 = vmatprep.subr.bf16.mxu0 0
        %583 = vmatpush1.bf16.msra.mxu0 0
        %584 = vmatprep.subr.bf16.mxu0 0
        %585 = vmatpush1.bf16.msra.mxu0 %v572
        %586 = vmatprep.subr.bf16.mxu0 0
        %587 = vmatpush1.bf16.msra.mxu0 %v546
        %588 = vmatprep.subr.bf16.mxu0 0
        %589 = vmatpush1.bf16.msra.mxu0 %v545
        %590 = vmatprep.subr.bf16.mxu0 0
        %591 = vmatpush2.bf16.msra.mxu0 0
        %592 = vmatprep.subr.bf16.mxu0 0
        %593 = vmatpush2.bf16.msra.mxu0 0
        %594 = vmatprep.subr.bf16.mxu0 0
        %595 = vmatpush2.bf16.msra.mxu0 0
        %596 = vmatprep.subr.bf16.mxu0 0
        %597 = vmatpush2.bf16.msra.mxu0 0
        %598 = vmatprep.subr.bf16.mxu0 0
        %599 = vmatpush2.bf16.msra.mxu0 0
        %600 = vmatprep.subr.bf16.mxu0 0
        %601 = vmatpush2.bf16.msra.mxu0 0
        %602 = vmatprep.subr.bf16.mxu0 0
        %603 = vmatpush2.bf16.msra.mxu0 0
        %604 = vmatprep.subr.bf16.mxu0 0
        %605 = vmatpush2.bf16.msra.mxu0 0
        %606 = vmatprep.mubr.bf16.mxu0 0
        %607 = vmatmul.mubr.bf16.gmra.mxu0 %v551
        %v608 = vpop.f32.mrf.mxu0
        %v609 = vadd.f32 0.0, %v608
        %v610 = vpop.f32.mrf.mxu0
        %v611 = vpop.f32.mrf.mxu0
        %v612 = vadd.f32 0.0, %v611
        %v613 = vpop.f32.mrf.mxu0
        %614 = vmatprep.mubr.bf16.mxu0 0
        %615 = vmatmul.mubr.bf16.gmra.mxu0 %v554
        %v616 = vpop.f32.mrf.mxu0
        %v617 = vadd.f32 0.0, %v616
        %v618 = vpop.f32.mrf.mxu0
        %v619 = vpop.f32.mrf.mxu0
        %v620 = vadd.f32 0.0, %v619
        %v621 = vpop.f32.mrf.mxu0
        %622 = vmatprep.mubr.bf16.mxu0 0
        %623 = vmatmul.mubr.bf16.gmra.mxu0 %v557
        %v624 = vpop.f32.mrf.mxu0
        %v625 = vadd.f32 0.0, %v624
        %v626 = vpop.f32.mrf.mxu0
        %v627 = vpop.f32.mrf.mxu0
        %v628 = vadd.f32 0.0, %v627
        %v629 = vpop.f32.mrf.mxu0
        %630 = vmatprep.mubr.bf16.mxu0 0
        %631 = vmatmul.mubr.bf16.gmra.mxu0 %v560
        %v632 = vpop.f32.mrf.mxu0
        %v633 = vadd.f32 0.0, %v632
        %v634 = vpop.f32.mrf.mxu0
        %v635 = vpop.f32.mrf.mxu0
        %v636 = vadd.f32 0.0, %v635
        %v637 = vpop.f32.mrf.mxu0
        %638 = vmatprep.mubr.bf16.mxu0 0
        %639 = vmatmul.mubr.bf16.gmra.mxu0 %v563
        %v640 = vpop.f32.mrf.mxu0
        %v641 = vadd.f32 0.0, %v640
        %v642 = vpop.f32.mrf.mxu0
        %v643 = vpop.f32.mrf.mxu0
        %v644 = vadd.f32 0.0, %v643
        %v645 = vpop.f32.mrf.mxu0
        %646 = vmatprep.mubr.bf16.mxu0 0
        %647 = vmatmul.mubr.bf16.gmra.mxu0 %v566
        %v648 = vpop.f32.mrf.mxu0
        %v649 = vadd.f32 0.0, %v648
        %v650 = vpop.f32.mrf.mxu0
        %v651 = vpop.f32.mrf.mxu0
        %v652 = vadd.f32 0.0, %v651
        %v653 = vpop.f32.mrf.mxu0
        %654 = vmatprep.mubr.bf16.mxu0 0
        %655 = vmatmul.mubr.bf16.gmra.mxu0 %v569
        %v656 = vpop.f32.mrf.mxu0
        %v657 = vadd.f32 0.0, %v656
        %v658 = vpop.f32.mrf.mxu0
        %v659 = vpop.f32.mrf.mxu0
        %v660 = vpop.f32.mrf.mxu0
        %661 = vdwg.mxu0
        %s662 = sld [smem:[#allocation2]]
        %v663 = vstv %s662
        %v664 = vadd.f32 %v323, %v663
        %v665 = vadd.f32 %v326, %v663
        %v666 = vadd.f32 %v331, %v663
        %v667 = vadd.f32 %v334, %v663
        %v668 = vadd.f32 %v339, %v663
        %v669 = vadd.f32 %v342, %v663
        %v670 = vadd.f32 %v347, %v663
        %v671 = vadd.f32 %v350, %v663
        %v672 = vadd.f32 %v355, %v663
        %v673 = vadd.f32 %v358, %v663
        %v674 = vadd.f32 %v363, %v663
        %v675 = vadd.f32 %v366, %v663
        %v676 = vadd.f32 %v371, %v663
        %690 = vrot.lane.b32.xlu0 %v457, 12
        %v691 = vpop.permute.xlu0 %690
        %692 = vrot.lane.b32.xlu0 %v460, 12
        %v693 = vpop.permute.xlu0 %692
        %694 = vrot.lane.b32.xlu0 %v465, 12
        %v695 = vpop.permute.xlu0 %694
        %696 = vrot.lane.b32.xlu0 %v468, 12
        %v697 = vpop.permute.xlu0 %696
        %698 = vrot.lane.b32.xlu0 %v473, 12
        %v699 = vpop.permute.xlu0 %698
        %700 = vrot.lane.b32.xlu0 %v476, 12
        %v701 = vpop.permute.xlu0 %700
        %702 = vrot.lane.b32.xlu0 %v481, 12
        %v703 = vpop.permute.xlu0 %702
        %704 = vrot.lane.b32.xlu0 %v484, 12
        %v705 = vpop.permute.xlu0 %704
        %706 = vrot.lane.b32.xlu0 %v489, 12
        %v707 = vpop.permute.xlu0 %706
        %708 = vrot.lane.b32.xlu0 %v492, 12
        %v709 = vpop.permute.xlu0 %708
        %710 = vrot.lane.b32.xlu0 %v497, 12
        %v711 = vpop.permute.xlu0 %710
        %712 = vrot.lane.b32.xlu0 %v500, 12
        %v713 = vpop.permute.xlu0 %712
        %714 = vrot.lane.b32.xlu0 %v505, 12
        %v715 = vpop.permute.xlu0 %714
        %v729 = vadd.f32 %v664, %v691
        %v730 = vadd.f32 %v665, %v693
        %v731 = vadd.f32 %v666, %v695
        %v732 = vadd.f32 %v667, %v697
        %v733 = vadd.f32 %v668, %v699
        %v734 = vadd.f32 %v669, %v701
        %v735 = vadd.f32 %v670, %v703
        %v736 = vadd.f32 %v671, %v705
        %v737 = vadd.f32 %v672, %v707
        %v738 = vadd.f32 %v673, %v709
        %v739 = vadd.f32 %v674, %v711
        %v740 = vadd.f32 %v675, %v713
        %v741 = vadd.f32 %v676, %v715
        %755 = vrot.lane.b32.xlu0 %v609, 12
        %v756 = vpop.permute.xlu0 %755
        %757 = vrot.lane.b32.xlu0 %v612, 12
        %v758 = vpop.permute.xlu0 %757
        %759 = vrot.lane.b32.xlu0 %v617, 12
        %v760 = vpop.permute.xlu0 %759
        %761 = vrot.lane.b32.xlu0 %v620, 12
        %v762 = vpop.permute.xlu0 %761
        %763 = vrot.lane.b32.xlu0 %v625, 12
        %v764 = vpop.permute.xlu0 %763
        %765 = vrot.lane.b32.xlu0 %v628, 12
        %v766 = vpop.permute.xlu0 %765
        %767 = vrot.lane.b32.xlu0 %v633, 12
        %v768 = vpop.permute.xlu0 %767
        %769 = vrot.lane.b32.xlu0 %v636, 12
        %v770 = vpop.permute.xlu0 %769
        %771 = vrot.lane.b32.xlu0 %v641, 12
        %v772 = vpop.permute.xlu0 %771
        %773 = vrot.lane.b32.xlu0 %v644, 12
        %v774 = vpop.permute.xlu0 %773
        %775 = vrot.lane.b32.xlu0 %v649, 12
        %v776 = vpop.permute.xlu0 %775
        %777 = vrot.lane.b32.xlu0 %v652, 12
        %v778 = vpop.permute.xlu0 %777
        %779 = vrot.lane.b32.xlu0 %v657, 12
        %v780 = vpop.permute.xlu0 %779
        %v794 = vadd.f32 %v729, %v756
        %v795 = vadd.f32 %v730, %v758
        %v796 = vadd.f32 %v731, %v760
        %v797 = vadd.f32 %v732, %v762
        %v798 = vadd.f32 %v733, %v764
        %v799 = vadd.f32 %v734, %v766
        %v800 = vadd.f32 %v735, %v768
        %v801 = vadd.f32 %v736, %v770
        %v802 = vadd.f32 %v737, %v772
        %v803 = vadd.f32 %v738, %v774
        %v804 = vadd.f32 %v739, %v776
        %v805 = vadd.f32 %v740, %v778
        %v806 = vadd.f32 %v741, %v780
        %v807 = vxor.u32 %v794, 2147483648
        %v808 = vxor.u32 %v795, 2147483648
        %v809 = vxor.u32 %v796, 2147483648
        %v810 = vxor.u32 %v797, 2147483648
        %v811 = vxor.u32 %v798, 2147483648
        %v812 = vxor.u32 %v799, 2147483648
        %v813 = vxor.u32 %v800, 2147483648
        %v814 = vxor.u32 %v801, 2147483648
        %v815 = vxor.u32 %v802, 2147483648
        %v816 = vxor.u32 %v803, 2147483648
        %v817 = vxor.u32 %v804, 2147483648
        %v818 = vxor.u32 %v805, 2147483648
        %v819 = vxor.u32 %v806, 2147483648
        %v820 = vmul.f32 %v807, 1.442695
        %v821 = vpow.pop %v820
        %v822 = vmul.f32 %v808, 1.442695
        %v823 = vpow.pop %v822
        %v824 = vmul.f32 %v809, 1.442695
        %v825 = vpow.pop %v824
        %v826 = vmul.f32 %v810, 1.442695
        %v827 = vpow.pop %v826
        %v828 = vmul.f32 %v811, 1.442695
        %v829 = vpow.pop %v828
        %v830 = vmul.f32 %v812, 1.442695
        %v831 = vpow.pop %v830
        %v832 = vmul.f32 %v813, 1.442695
        %v833 = vpow.pop %v832
        %v834 = vmul.f32 %v814, 1.442695
        %v835 = vpow.pop %v834
        %v836 = vmul.f32 %v815, 1.442695
        %v837 = vpow.pop %v836
        %v838 = vmul.f32 %v816, 1.442695
        %v839 = vpow.pop %v838
        %v840 = vmul.f32 %v817, 1.442695
        %v841 = vpow.pop %v840
        %v842 = vmul.f32 %v818, 1.442695
        %v843 = vpow.pop %v842
        %v844 = vmul.f32 %v819, 1.442695
        %v845 = vpow.pop %v844
        %v846 = vadd.f32 %v821, 1.0
        %v847 = vadd.f32 %v823, 1.0
        %v848 = vadd.f32 %v825, 1.0
        %v849 = vadd.f32 %v827, 1.0
        %v850 = vadd.f32 %v829, 1.0
        %v851 = vadd.f32 %v831, 1.0
        %v852 = vadd.f32 %v833, 1.0
        %v853 = vadd.f32 %v835, 1.0
        %v854 = vadd.f32 %v837, 1.0
        %v855 = vadd.f32 %v839, 1.0
        %v856 = vadd.f32 %v841, 1.0
        %v857 = vadd.f32 %v843, 1.0
        %v858 = vadd.f32 %v845, 1.0
        %v859 = vrcp.pop %v846
        %v860 = vmul.f32 1.0, %v859
        %v861 = vrcp.pop %v847
        %v862 = vmul.f32 1.0, %v861
        %v863 = vrcp.pop %v848
        %v864 = vmul.f32 1.0, %v863
        %v865 = vrcp.pop %v849
        %v866 = vmul.f32 1.0, %v865
        %v867 = vrcp.pop %v850
        %v868 = vmul.f32 1.0, %v867
        %v869 = vrcp.pop %v851
        %v870 = vmul.f32 1.0, %v869
        %v871 = vrcp.pop %v852
        %v872 = vmul.f32 1.0, %v871
        %v873 = vrcp.pop %v853
        %v874 = vmul.f32 1.0, %v873
        %v875 = vrcp.pop %v854
        %v876 = vmul.f32 1.0, %v875
        %v877 = vrcp.pop %v855
        %v878 = vmul.f32 1.0, %v877
        %v879 = vrcp.pop %v856
        %v880 = vmul.f32 1.0, %v879
        %v881 = vrcp.pop %v857
        %v882 = vmul.f32 1.0, %v881
        %v883 = vrcp.pop %v858
        %v884 = vmul.f32 1.0, %v883
        %898 = vrot.lane.b32.xlu0 %v860, 116
        %v899 = vpop.permute.xlu0 %898
        %900 = vrot.lane.b32.xlu0 %v862, 116
        %v901 = vpop.permute.xlu0 %900
        %902 = vrot.lane.b32.xlu0 %v864, 116
        %v903 = vpop.permute.xlu0 %902
        %904 = vrot.lane.b32.xlu0 %v866, 116
        %v905 = vpop.permute.xlu0 %904
        %906 = vrot.lane.b32.xlu0 %v868, 116
        %v907 = vpop.permute.xlu0 %906
        %908 = vrot.lane.b32.xlu0 %v870, 116
        %v909 = vpop.permute.xlu0 %908
        %910 = vrot.lane.b32.xlu0 %v872, 116
        %v911 = vpop.permute.xlu0 %910
        %912 = vrot.lane.b32.xlu0 %v874, 116
        %v913 = vpop.permute.xlu0 %912
        %914 = vrot.lane.b32.xlu0 %v876, 116
        %v915 = vpop.permute.xlu0 %914
        %916 = vrot.lane.b32.xlu0 %v878, 116
        %v917 = vpop.permute.xlu0 %916
        %918 = vrot.lane.b32.xlu0 %v880, 116
        %v919 = vpop.permute.xlu0 %918
        %920 = vrot.lane.b32.xlu0 %v882, 116
        %v921 = vpop.permute.xlu0 %920
        %922 = vrot.lane.b32.xlu0 %v884, 116
        %v923 = vpop.permute.xlu0 %922
        %vm937 = vcmask 7168
        %938 = vst.msk [vmem:[%s200] sm:$0xff] %vm937, %v899
        %939 = vst.msk [vmem:[%s200 + $0x8] sm:$0xff] %vm937, %v901
        %940 = vst.msk [vmem:[%s200 + $0x10] sm:$0xff] %vm937, %v903
        %941 = vst.msk [vmem:[%s200 + $0x18] sm:$0xff] %vm937, %v905
        %942 = vst.msk [vmem:[%s200 + $0x20] sm:$0xff] %vm937, %v907
        %943 = vst.msk [vmem:[%s200 + $0x28] sm:$0xff] %vm937, %v909
        %944 = vst.msk [vmem:[%s200 + $0x30] sm:$0xff] %vm937, %v911
        %945 = vst.msk [vmem:[%s200 + $0x38] sm:$0xff] %vm937, %v913
        %946 = vst.msk [vmem:[%s200 + $0x40] sm:$0xff] %vm937, %v915
        %947 = vst.msk [vmem:[%s200 + $0x48] sm:$0xff] %vm937, %v917
        %948 = vst.msk [vmem:[%s200 + $0x50] sm:$0xff] %vm937, %v919
        %949 = vst.msk [vmem:[%s200 + $0x58] sm:$0xff] %vm937, %v921
        %950 = vst.msk [vmem:[%s200 + $0x60] sm:$0xff] %vm937, %v923
        %s951 = sand.u32 %s113, 1
        %s952 = sand.u32 %s113, 1
        %s953 = smul.addr %s952, 104
        %s954 = scalar_lea.vmem [#allocation3], %s953
        // Predicated region
        $region37: #{tpu_custom_call.1} parent=35 // pred_check
          %p955 = pneg %p123
        $region38: #{tpu_custom_call.1} parent=35 // pred_check_branch
          %957 = sbr.rel (%p955) target = $region40
        $region39: #{tpu_custom_call.1} parent=35 // pred_region
          %s958 = smul.u32 13, %s16
          %s959 = ssub.s32 25, %s958
          %p960 = scmp.lt.s32.totalorder %s959, 13
          %s961 = scalar_select %p960, %s959, 13
          %s962 = smul.u32 128, %s961
          %p963 = scmp.ne.s32.totalorder 0, %s962
          %s964 = smul.addr %s958, 8
          %s965 = scalar_lea.vmem %s4, %s964
          // Predicated region
          $region41: #{tpu_custom_call.1} parent=39 // pred_check
            %p966 = pneg %p963
          $region42: #{tpu_custom_call.1} parent=39 // pred_check_branch
            %968 = sbr.rel (%p966) target = $region44
          $region43: #{tpu_custom_call.1} parent=39 // pred_region
            // Predicated region
            $region45: #{tpu_custom_call.1} parent=43 // pred_check
              _
            $region46: #{tpu_custom_call.1} parent=43 // pred_check_branch
              %970 = sbr.rel (0) target = $region48
            $region47: #{tpu_custom_call.1} parent=43 // pred_region
              // Predicated region
              $region67: #{tpu_custom_call.1} parent=47 // pred_check
                _
              $region68: #{tpu_custom_call.1} parent=47 // pred_check_branch
                %1045 = sbr.rel (0) target = $region70
              $region69: #{tpu_custom_call.1} parent=47 // pred_region
                %s1046 = sdiv.u32.pop %s961, 13
                %s1047 = srem.u32.pop %s961, 13
                // While loop
                $region71: #{tpu_custom_call.1} parent=69 // loop_pre_header
                  _
                $region72: #{tpu_custom_call.1} parent=69 // loop_header
                  %s1049 = sphi 0, %s1051
                  %p1050 = scmp.ge.s32.totalorder %s1049, %s1046
                  %s1054 = sphi 0, %s1085
                  %s1055 = sphi %s954, %s1088
                  %s1056 = sphi %s965, %s1089
                $region73: #{tpu_custom_call.1} parent=69 // loop_header_branch
                  %1053 = sbr.rel (%p1050) target = $region77
                $region74: #{tpu_custom_call.1} parent=69 // loop_body
                  %v1057 = vld [vmem:[%s1055] sm:$0xff]
                  %1058 = vst [vmem:[%s1056] sm:$0xff] %v1057
                  %v1059 = vld [vmem:[%s1055 + $0x8] sm:$0xff]
                  %1060 = vst [vmem:[%s1056 + $0x8] sm:$0xff] %v1059
                  %v1061 = vld [vmem:[%s1055 + $0x10] sm:$0xff]
                  %1062 = vst [vmem:[%s1056 + $0x10] sm:$0xff] %v1061
                  %v1063 = vld [vmem:[%s1055 + $0x18] sm:$0xff]
                  %1064 = vst [vmem:[%s1056 + $0x18] sm:$0xff] %v1063
                  %v1065 = vld [vmem:[%s1055 + $0x20] sm:$0xff]
                  %1066 = vst [vmem:[%s1056 + $0x20] sm:$0xff] %v1065
                  %v1067 = vld [vmem:[%s1055 + $0x28] sm:$0xff]
                  %1068 = vst [vmem:[%s1056 + $0x28] sm:$0xff] %v1067
                  %v1069 = vld [vmem:[%s1055 + $0x30] sm:$0xff]
                  %1070 = vst [vmem:[%s1056 + $0x30] sm:$0xff] %v1069
                  %v1071 = vld [vmem:[%s1055 + $0x38] sm:$0xff]
                  %1072 = vst [vmem:[%s1056 + $0x38] sm:$0xff] %v1071
                  %v1073 = vld [vmem:[%s1055 + $0x40] sm:$0xff]
                  %1074 = vst [vmem:[%s1056 + $0x40] sm:$0xff] %v1073
                  %v1075 = vld [vmem:[%s1055 + $0x48] sm:$0xff]
                  %1076 = vst [vmem:[%s1056 + $0x48] sm:$0xff] %v1075
                  %v1077 = vld [vmem:[%s1055 + $0x50] sm:$0xff]
                  %1078 = vst [vmem:[%s1056 + $0x50] sm:$0xff] %v1077
                  %v1079 = vld [vmem:[%s1055 + $0x58] sm:$0xff]
                  %1080 = vst [vmem:[%s1056 + $0x58] sm:$0xff] %v1079
                  %v1081 = vld [vmem:[%s1055 + $0x60] sm:$0xff]
                  %1082 = vst [vmem:[%s1056 + $0x60] sm:$0xff] %v1081
                  %s1083 = sadd.s32 1, %s1054
                  %p1084 = scmp.ge.s32.totalorder %s1083, %s1046
                  %s1085 = scalar_select %p1084, 0, %s1083
                  %s1086 = smul.u32 %s1085, 104
                  %s1087 = smul.u32 %s1085, 104
                  %s1088 = scalar_lea.vmem %s954, %s1086 [#allocation3]
                  %s1089 = scalar_lea.vmem %s965, %s1087
                $region75: #{tpu_custom_call.1} parent=69 // loop_footer
                  %s1051 = sadd.s32 %s1049, 1
                $region76: #{tpu_custom_call.1} parent=69 // loop_footer_branch
                  %1048 = sbr.rel target = $region72
                $region77: #{tpu_custom_call.1} parent=69 // loop_exit
                  _
                %s1090 = sdiv.u32.pop %s961, 13
                %s1091 = srem.u32.pop %s961, 13
                %s1092 = smul.u32 %s1090, 13
                %s1093 = smul.u32 8, %s1092
                %s1094 = scalar_lea.vmem %s954, %s1093 [#allocation3]
                %s1095 = smul.u32 8, %s1092
                %s1096 = scalar_lea.vmem %s965, %s1095
                // While loop
                $region78: #{tpu_custom_call.1} parent=69 // loop_pre_header
                  _
                $region79: #{tpu_custom_call.1} parent=69 // loop_header
                  %s1098 = sphi 0, %s1100
                  %p1099 = scmp.ge.s32.totalorder %s1098, %s1091
                  %s1103 = sphi 0, %s1110
                  %s1104 = sphi %s1094, %s1113
                  %s1105 = sphi %s1096, %s1114
                $region80: #{tpu_custom_call.1} parent=69 // loop_header_branch
                  %1102 = sbr.rel (%p1099) target = $region84
                $region81: #{tpu_custom_call.1} parent=69 // loop_body
                  %v1106 = vld [vmem:[%s1104] sm:$0xff]
                  %1107 = vst [vmem:[%s1105] sm:$0xff] %v1106
                  %s1108 = sadd.s32 1, %s1103
                  %p1109 = scmp.ge.s32.totalorder %s1108, %s1091
                  %s1110 = scalar_select %p1109, 0, %s1108
                  %s1111 = smul.u32 %s1110, 8
                  %s1112 = smul.u32 %s1110, 8
                  %s1113 = scalar_lea.vmem %s1094, %s1111 [#allocation3]
                  %s1114 = scalar_lea.vmem %s1096, %s1112
                $region82: #{tpu_custom_call.1} parent=69 // loop_footer
                  %s1100 = sadd.s32 %s1098, 1
                $region83: #{tpu_custom_call.1} parent=69 // loop_footer_branch
                  %1097 = sbr.rel target = $region79
                $region84: #{tpu_custom_call.1} parent=69 // loop_exit
                  _
              $region70: #{tpu_custom_call.1} parent=47 // pred_fallthru
                _
              // Predicated region
              $region85: #{tpu_custom_call.1} parent=47 // pred_check
                _
              $region86: #{tpu_custom_call.1} parent=47 // pred_check_branch
                %1116 = sbr.rel target = $region88
              $region87: #{tpu_custom_call.1} parent=47 // pred_region
                _
              $region88: #{tpu_custom_call.1} parent=47 // pred_fallthru
                _
            $region48: #{tpu_custom_call.1} parent=43 // pred_fallthru
              _
            // Predicated region
            $region49: #{tpu_custom_call.1} parent=43 // pred_check
              _
            $region50: #{tpu_custom_call.1} parent=43 // pred_check_branch
              %972 = sbr.rel target = $region52
            $region51: #{tpu_custom_call.1} parent=43 // pred_region
              %s974 = ssub.s32 256, 1
              %s975 = sdiv.u32.pop %s961, 13
              %s976 = srem.u32.pop %s961, 13
              // While loop
              $region53: #{tpu_custom_call.1} parent=51 // loop_pre_header
                _
              $region54: #{tpu_custom_call.1} parent=51 // loop_header
                %s978 = sphi 0, %s980
                %p979 = scmp.ge.s32.totalorder %s978, %s975
                %s983 = sphi 0, %s1014
                %s984 = sphi %s954, %s1017
                %s985 = sphi %s965, %s1018
              $region55: #{tpu_custom_call.1} parent=51 // loop_header_branch
                %982 = sbr.rel (%p979) target = $region59
              $region56: #{tpu_custom_call.1} parent=51 // loop_body
                %v986 = vld [vmem:[%s984] sm:%s974]
                %987 = vst [vmem:[%s985] sm:%s974] %v986
                %v988 = vld [vmem:[%s984 + $0x8] sm:%s974]
                %989 = vst [vmem:[%s985 + $0x8] sm:%s974] %v988
                %v990 = vld [vmem:[%s984 + $0x10] sm:%s974]
                %991 = vst [vmem:[%s985 + $0x10] sm:%s974] %v990
                %v992 = vld [vmem:[%s984 + $0x18] sm:%s974]
                %993 = vst [vmem:[%s985 + $0x18] sm:%s974] %v992
                %v994 = vld [vmem:[%s984 + $0x20] sm:%s974]
                %995 = vst [vmem:[%s985 + $0x20] sm:%s974] %v994
                %v996 = vld [vmem:[%s984 + $0x28] sm:%s974]
                %997 = vst [vmem:[%s985 + $0x28] sm:%s974] %v996
                %v998 = vld [vmem:[%s984 + $0x30] sm:%s974]
                %999 = vst [vmem:[%s985 + $0x30] sm:%s974] %v998
                %v1000 = vld [vmem:[%s984 + $0x38] sm:%s974]
                %1001 = vst [vmem:[%s985 + $0x38] sm:%s974] %v1000
                %v1002 = vld [vmem:[%s984 + $0x40] sm:%s974]
                %1003 = vst [vmem:[%s985 + $0x40] sm:%s974] %v1002
                %v1004 = vld [vmem:[%s984 + $0x48] sm:%s974]
                %1005 = vst [vmem:[%s985 + $0x48] sm:%s974] %v1004
                %v1006 = vld [vmem:[%s984 + $0x50] sm:%s974]
                %1007 = vst [vmem:[%s985 + $0x50] sm:%s974] %v1006
                %v1008 = vld [vmem:[%s984 + $0x58] sm:%s974]
                %1009 = vst [vmem:[%s985 + $0x58] sm:%s974] %v1008
                %v1010 = vld [vmem:[%s984 + $0x60] sm:%s974]
                %1011 = vst [vmem:[%s985 + $0x60] sm:%s974] %v1010
                %s1012 = sadd.s32 1, %s983
                %p1013 = scmp.ge.s32.totalorder %s1012, %s975
                %s1014 = scalar_select %p1013, 0, %s1012
                %s1015 = smul.u32 %s1014, 104
                %s1016 = smul.u32 %s1014, 104
                %s1017 = scalar_lea.vmem %s954, %s1015 [#allocation3]
                %s1018 = scalar_lea.vmem %s965, %s1016
              $region57: #{tpu_custom_call.1} parent=51 // loop_footer
                %s980 = sadd.s32 %s978, 1
              $region58: #{tpu_custom_call.1} parent=51 // loop_footer_branch
                %977 = sbr.rel target = $region54
              $region59: #{tpu_custom_call.1} parent=51 // loop_exit
                _
              %s1019 = sdiv.u32.pop %s961, 13
              %s1020 = srem.u32.pop %s961, 13
              %s1021 = smul.u32 %s1019, 13
              %s1022 = smul.u32 8, %s1021
              %s1023 = scalar_lea.vmem %s954, %s1022 [#allocation3]
              %s1024 = smul.u32 8, %s1021
              %s1025 = scalar_lea.vmem %s965, %s1024
              // While loop
              $region60: #{tpu_custom_call.1} parent=51 // loop_pre_header
                _
              $region61: #{tpu_custom_call.1} parent=51 // loop_header
                %s1027 = sphi 0, %s1029
                %p1028 = scmp.ge.s32.totalorder %s1027, %s1020
                %s1032 = sphi 0, %s1039
                %s1033 = sphi %s1023, %s1042
                %s1034 = sphi %s1025, %s1043
              $region62: #{tpu_custom_call.1} parent=51 // loop_header_branch
                %1031 = sbr.rel (%p1028) target = $region66
              $region63: #{tpu_custom_call.1} parent=51 // loop_body
                %v1035 = vld [vmem:[%s1033] sm:%s974]
                %1036 = vst [vmem:[%s1034] sm:%s974] %v1035
                %s1037 = sadd.s32 1, %s1032
                %p1038 = scmp.ge.s32.totalorder %s1037, %s1020
                %s1039 = scalar_select %p1038, 0, %s1037
                %s1040 = smul.u32 %s1039, 8
                %s1041 = smul.u32 %s1039, 8
                %s1042 = scalar_lea.vmem %s1023, %s1040 [#allocation3]
                %s1043 = scalar_lea.vmem %s1025, %s1041
              $region64: #{tpu_custom_call.1} parent=51 // loop_footer
                %s1029 = sadd.s32 %s1027, 1
              $region65: #{tpu_custom_call.1} parent=51 // loop_footer_branch
                %1026 = sbr.rel target = $region61
              $region66: #{tpu_custom_call.1} parent=51 // loop_exit
                _
            $region52: #{tpu_custom_call.1} parent=43 // pred_fallthru
              _
          $region44: #{tpu_custom_call.1} parent=39 // pred_fallthru
            _
          %1117 = vnop
        $region40: #{tpu_custom_call.1} parent=35 // pred_fallthru
          _
      $region36: #{tpu_custom_call.1} parent=5 // pred_fallthru
        _
      %p1118 = scmp.le.s32.totalorder 2, %s11
      // Predicated region
      $region89: #{tpu_custom_call.1} parent=5 // pred_check
        %p1119 = pneg %p1118
      $region90: #{tpu_custom_call.1} parent=5 // pred_check_branch
        %1121 = sbr.rel (%p1119) target = $region92
      $region91: #{tpu_custom_call.1} parent=5 // pred_region
        %s1122 = ssub.s32 %s11, 2
        // Predicated region
        $region93: #{tpu_custom_call.1} parent=91 // pred_check
          %p1123 = pneg %p129
        $region94: #{tpu_custom_call.1} parent=91 // pred_check_branch
          %1125 = sbr.rel (%p1123) target = $region96
        $region95: #{tpu_custom_call.1} parent=91 // pred_region
          %s1126 = sand.u32 %s114, 1
          %s1127 = sand.u32 %s114, 1
          %s1128 = smul.addr %s1127, 104
          %s1129 = scalar_lea.vmem [#allocation3], %s1128
        $region96: #{tpu_custom_call.1} parent=91 // pred_fallthru
          _
      $region92: #{tpu_custom_call.1} parent=5 // pred_fallthru
        _
    $region6: #{tpu_custom_call.1} parent=1 // loop_footer
      %s15 = sadd.s32 1, %s11
    $region7: #{tpu_custom_call.1} parent=1 // loop_footer_branch
      %10 = sbr.rel target = $region3
    $region8: #{tpu_custom_call.1} parent=1 // loop_exit
      _

</llo_original>
